<compile_context>
chip_gen: v6e
topology: v6e:2x2x1
jax: 0.10.0
libtpu: 0.0.40
codegen_flags: <defaults>
</compile_context>

<pallas_src>
import math

import jax
import jax.numpy as jnp
from jax.experimental import pallas as pl
from jax.experimental.pallas import tpu as pltpu

VOCAB = 39972 + 1
PAD_IDX = 39972
COMPUTE_DTYPE = jnp.bfloat16


def _round_up(x, m):
    return ((x + m - 1) // m) * m


def _chip_tuning():
    """Returns (target token rows per tile, chip has 2 TensorCores)."""
    kind = ""
    try:
        kind = jax.devices()[0].device_kind.lower()
    except Exception:
        pass
    if "v7" in kind:
        return 32768, True     # ~3.2 TB/s HBM, 2 TCs: big tiles + megacore row split
    if "v6" in kind:
        return 16384, False    # ~1.4 TB/s HBM, 32 MiB default scoped VMEM
    return 8192, False         # v5e / unknown: fits the 16 MiB default scoped VMEM


def _linear_relu_kernel(e_ref, w_ref, b_ref, o_ref):
    # e_ref: (TG, pack*2h) bf16   w_ref: (pack*2h, pack*h) bf16
    # b_ref: (1, pack*h)  bf16    o_ref: (TG, pack*h) out_dtype
    y = jnp.dot(e_ref[...], w_ref[...], preferred_element_type=jnp.float32)
    y = y + b_ref[...].astype(jnp.float32)
    o_ref[...] = jnp.maximum(y, 0.0).astype(o_ref.dtype)


def _pack_params(w_t, bias, pack, dtype):
    """Block-diagonal weight / tiled bias so `pack` token rows share one lane-dense row."""
    w = w_t.astype(dtype)
    b = bias.astype(dtype)
    h = w.shape[1]
    w_big = jnp.kron(jnp.eye(pack, dtype=dtype), w)          # (pack*2h, pack*h)
    b_big = jnp.tile(b, pack).reshape(1, pack * h)
    return w_big, b_big


def pharmacophore_encoder(pcp_batch, pcp_masks, emb_table, w_t, bias, *,
                          tile_rows=None, out_dtype=jnp.float32):
    """Pallas forward pass. Returns (encoded (B, S, h), pcp_masks passthrough)."""
    B, S = pcp_batch.shape
    two_h = emb_table.shape[1]
    h = w_t.shape[1]
    N = B * S

    tile_auto, two_tc = _chip_tuning()
    if tile_rows is None:
        tile_rows = tile_auto

    # Row-packing factor so the kernel's I/O minor dims are 128-lane multiples.
    pack = 128 // math.gcd(h, 128)
    if pack > 16 or (pack * two_h) * (pack * h) * 2 > (4 << 20):
        pack = 1   # awkward h: fall back to plain layout (correct, partially masked stores)

    in_cols = pack * two_h
    out_cols = pack * h

    # Minimal row padding (only up to `pack`; usually none) so there is no post-kernel
    # full-output slice copy.  The ragged last grid block is handled by masked stores.
    n_pad = _round_up(N, pack)
    groups = n_pad // pack

    # Tile size in packed rows. Big tiles amortize the ~0.35us fixed grid-step cost.
    # The ">=2 steps" cap only applies on 2-TensorCore chips (v7x megacore sharding);
    # on single-TC chips it would just double per-step overhead for zero parallelism.
    tg = max(16, _round_up(max(tile_rows // pack, 1), 16))
    if two_tc:
        tg = min(tg, max(16, _round_up(pl.cdiv(groups, 2), 16)))
    tg = min(tg, _round_up(groups, 16))
    grid = pl.cdiv(groups, tg)

    # Embedding gather stays in XLA; allow_input_fusion lets XLA fuse it into the Pallas
    # input pipeline instead of bouncing the (groups, pack*2h) slab through HBM.
    ids = pcp_batch.reshape(-1).astype(jnp.int32)
    if n_pad != N:
        ids = jnp.pad(ids, (0, n_pad - N), constant_values=PAD_IDX)
    emb = jnp.take(emb_table, ids, axis=0).astype(COMPUTE_DTYPE).reshape(groups, in_cols)

    w_big, b_big = _pack_params(w_t, bias, pack, COMPUTE_DTYPE)

    act_bytes = jnp.dtype(COMPUTE_DTYPE).itemsize
    out_bytes = jnp.dtype(out_dtype).itemsize
    # Double-buffered activation + output tiles; weight/bias also double-buffered (constant
    # index_map) -- small at bf16.
    vmem_need = (2 * tg * in_cols * act_bytes
                 + 2 * tg * out_cols * out_bytes
                 + 2 * (in_cols * out_cols + out_cols) * act_bytes)
    vmem_limit = None
    if vmem_need > (14 << 20):   # only raise above the v5e 16 MiB default when needed
        vmem_limit = int(min(vmem_need + (4 << 20), 48 << 20))

    cost = pl.CostEstimate(
        flops=2 * groups * in_cols * out_cols,
        transcendentals=0,
        bytes_accessed=int(groups * in_cols * act_bytes
                           + groups * out_cols * out_bytes
                           + (in_cols * out_cols + out_cols) * act_bytes),
    )

    out = pl.pallas_call(
        _linear_relu_kernel,
        out_shape=jax.ShapeDtypeStruct((groups, out_cols), out_dtype),
        grid=(grid,),
        in_specs=[
            pl.BlockSpec((tg, in_cols), lambda i: (i, 0)),         # activations (pipelined)
            pl.BlockSpec((in_cols, out_cols), lambda i: (0, 0)),   # weight (VMEM-resident)
            pl.BlockSpec((1, out_cols), lambda i: (0, 0)),         # bias (VMEM-resident)
        ],
        out_specs=pl.BlockSpec((tg, out_cols), lambda i: (i, 0)),
        compiler_params=pltpu.CompilerParams(
            dimension_semantics=("parallel",),           # megacore row-sharding (v7x)
            allow_input_fusion=[True, False, False],     # fuse the gather into the input pipeline
            vmem_limit_bytes=vmem_limit,
        ),
        cost_estimate=cost,
    )(emb, w_big, b_big)

    encoded = out.reshape(n_pad, h)
    if n_pad != N:
        encoded = encoded[:N]
    return encoded.reshape(B, S, h), pcp_masks


def init_params(key, h):
    """Deterministic synthetic parameters matching the module's shapes (table in bf16)."""
    k_emb, k_w, k_b = jax.random.split(key, 3)
    emb_table = (jax.random.normal(k_emb, (VOCAB, 2 * h), dtype=jnp.float32) * 0.02
                 ).astype(jnp.bfloat16)
    emb_table = emb_table.at[PAD_IDX].set(0.0)           # padding_idx row is zero
    # nn.Linear(h*2, h): weight (h, 2h), bias (h,).  Kernel consumes W^T (2h, h).
    w = jax.random.normal(k_w, (h, 2 * h), dtype=jnp.float32) * (1.0 / jnp.sqrt(2.0 * h))
    b = jax.random.normal(k_b, (h,), dtype=jnp.float32) * 0.01
    return emb_table, w.T, b


if __name__ == "__main__":
    h = 32
    d = 0.1  # dropout prob (identity in eval mode)

    key = jax.random.PRNGKey(0)
    k_params, k_ids1, k_ids2 = jax.random.split(key, 3)
    emb_table, w_t, bias = init_params(k_params, h)

    run = jax.jit(pharmacophore_encoder, static_argnames=("tile_rows", "out_dtype"))

    def reference(batch):
        e = jnp.take(emb_table, batch.reshape(-1), axis=0).astype(jnp.float32)
        w = w_t.astype(jnp.bfloat16).astype(jnp.float32)
        b = bias.astype(jnp.bfloat16).astype(jnp.float32)
        return jnp.maximum(e @ w + b, 0.0).reshape(*batch.shape, h)

    # Case 1: tiny shapes from the module spec (B=2, S=8), includes padding tokens.
    B, S = 2, 8
    pcp_batch = jax.random.randint(k_ids1, (B, S), 0, VOCAB, dtype=jnp.int32)
    pcp_batch = pcp_batch.at[0, -1].set(PAD_IDX).at[1, -2:].set(PAD_IDX)
    pcp_masks = pcp_batch != PAD_IDX

    encoded, masks = run(pcp_batch, pcp_masks, emb_table, w_t, bias)
    encoded = jax.block_until_ready(encoded)
    masks = jax.block_until_ready(masks)
    assert encoded.shape == (B, S, h)
    assert jnp.allclose(encoded, reference(pcp_batch), atol=1e-4, rtol=1e-3)

    # Case 2: ragged row count + forced multi-step grid with a masked last block.
    B2, S2 = 4, 333
    pcp_batch2 = jax.random.randint(k_ids2, (B2, S2), 0, VOCAB, dtype=jnp.int32)
    pcp_masks2 = pcp_batch2 != PAD_IDX
    encoded2, _ = run(pcp_batch2, pcp_masks2, emb_table, w_t, bias, tile_rows=512)
    encoded2 = jax.block_until_ready(encoded2)
    assert encoded2.shape == (B2, S2, h)
    assert jnp.allclose(encoded2, reference(pcp_batch2), atol=1e-4, rtol=1e-3)

    print("KERNEL_OK")
</pallas_src>

<mosaic_0001>
module attributes {stable_mosaic.version = 11 : i64} {
  func.func @_linear_relu_kernel(%arg0: i32, %arg1: memref<16x256xbf16, #tpu.memory_space<vmem>>, %arg2: memref<256x128xbf16, #tpu.memory_space<vmem>>, %arg3: memref<1x128xbf16, #tpu.memory_space<vmem>>, %arg4: memref<16x128xf32, #tpu.memory_space<vmem>>) attributes {dimension_semantics = [#tpu.dimension_semantics<parallel>], iteration_bounds = array<i64: 1>, scalar_prefetch = 0 : i64, scratch_operands = 0 : i64, tpu.core_type = #tpu.core_type<tc>, window_params = [{transform_indices = @transform_0, window_bounds = array<i64: 16, 256>}, {pipeline_mode = #tpu.pipeline_mode<synchronous>, transform_indices = @transform_1, window_bounds = array<i64: 256, 128>}, {pipeline_mode = #tpu.pipeline_mode<synchronous>, transform_indices = @transform_2, window_bounds = array<i64: 1, 128>}, {transform_indices = @transform_3, window_bounds = array<i64: 16, 128>}]} {
    %c0 = arith.constant 0 : index
    %c0_0 = arith.constant 0 : index
    %0 = vector.load %arg1[%c0, %c0_0] : memref<16x256xbf16, #tpu.memory_space<vmem>>, vector<16x256xbf16>
    %c0_1 = arith.constant 0 : index
    %c0_2 = arith.constant 0 : index
    %1 = vector.load %arg2[%c0_1, %c0_2] : memref<256x128xbf16, #tpu.memory_space<vmem>>, vector<256x128xbf16>
    %cst = arith.constant dense<0.000000e+00> : vector<16x128xf32>
    %2 = tpu.matmul %0, %1, %cst {dimension_numbers = #tpu.dot_dimension_numbers<[1], [0], [0], [1], [0, 0, 1, 1], [], []>} : vector<16x256xbf16>, vector<256x128xbf16>, vector<16x128xf32> -> vector<16x128xf32>
    %c0_3 = arith.constant 0 : index
    %c0_4 = arith.constant 0 : index
    %3 = vector.load %arg3[%c0_3, %c0_4] : memref<1x128xbf16, #tpu.memory_space<vmem>>, vector<1x128xbf16>
    %4 = arith.extf %3 : vector<1x128xbf16> to vector<1x128xf32>
    %5 = vector.broadcast %4 : vector<1x128xf32> to vector<16x128xf32>
    %6 = arith.addf %2, %5 : vector<16x128xf32>
    %cst_5 = arith.constant 0.000000e+00 : f32
    %7 = vector.broadcast %cst_5 : f32 to vector<16x128xf32>
    %8 = arith.maximumf %6, %7 : vector<16x128xf32>
    %c0_6 = arith.constant 0 : index
    %c0_7 = arith.constant 0 : index
    %9 = vector.load %arg4[%c0_6, %c0_7] : memref<16x128xf32, #tpu.memory_space<vmem>>, vector<16x128xf32>
    tpu.vector_store %arg4[%c0_6, %c0_7], %8 {strides = array<i32>} : memref<16x128xf32, #tpu.memory_space<vmem>>, vector<16x128xf32>,
    return
  }
  func.func @transform_0(%arg0: i32) -> (i32, i32) {
    %c0_i32 = arith.constant 0 : i32
    %c0_i32_0 = arith.constant 0 : i32
    return %arg0, %c0_i32 : i32, i32
  }
  func.func @transform_1(%arg0: i32) -> (i32, i32) {
    %c0_i32 = arith.constant 0 : i32
    %c0_i32_0 = arith.constant 0 : i32
    %c0_i32_1 = arith.constant 0 : i32
    return %c0_i32, %c0_i32_0 : i32, i32
  }
  func.func @transform_2(%arg0: i32) -> (i32, i32) {
    %c0_i32 = arith.constant 0 : i32
    %c0_i32_0 = arith.constant 0 : i32
    %c0_i32_1 = arith.constant 0 : i32
    return %c0_i32, %c0_i32_0 : i32, i32
  }
  func.func @transform_3(%arg0: i32) -> (i32, i32) {
    %c0_i32 = arith.constant 0 : i32
    %c0_i32_0 = arith.constant 0 : i32
    return %arg0, %c0_i32 : i32, i32
  }
}

</mosaic_0001>

<llo_original>
// kernel: tile.8
$region0: #{tile.8}
  #allocation0 [shape = 's32[1]{0}', space=sflag, size = 0x4, scoped, tag = 'scoped memory for tile.8']
  %s0 = inlined_call_operand.vmem [shape: bf16[32], index: 0, kind: input, shape index: {}]
  %s1 = inlined_call_operand.vmem [shape: bf16[4,32], index: 1, kind: output, shape index: {}]
  // Predicated region
  $region2: #{tile.8} parent=0 // pred_check
    _
  $region3: #{tile.8} parent=0 // pred_check_branch
    %3 = sbr.rel (0) target = $region5
  $region4: #{tile.8} parent=0 // pred_region
    _
  $region5: #{tile.8} parent=0 // pred_fallthru
    _
  %v4 = vld [vmem:[%s0] ss:$0 sm:$0xff]
  %v5 = vunpack.i.l.bf16 %v4
  %v7 = vunpack.i.h.bf16 %v4
  %v9 = vpack.c.bf16 0.0, %v5
  %10 = vst [vmem:[%s1] sm:$0x3] %v9

// kernel: tile.9
$region0: #{tile.9}
  %s0 = inlined_call_operand.vmem [shape: bf16[4,32], index: 0, kind: input, shape index: {}]
  %s1 = inlined_call_operand.vmem [shape: bf16[1,128], index: 1, kind: output, shape index: {}]
  $region1: #{tile.9} parent=0
    #allocation0 [shape = 'u8[4096]{0}', space=vmem, size = 0x1000, scoped, tag = 'scoped mem for output reshape']
    #allocation1 [shape = 'u8[4096]{0}', space=vmem, size = 0x1000, scoped, tag = 'scoped mem for input reshape']
    %s3 = smul.u32 2, 2
    %s4 = sshll.u32 1, %s3
    %s5 = ssub.s32 %s4, 1
    %s6 = sshrl.u32 %s5, 1
    %s7 = sor.u32 %s5, %s6
    %s8 = sand.u32 %s7, 85
    %s9 = sshrl.u32 %s8, 1
    %s10 = sor.u32 %s8, %s9
    %s11 = sand.u32 51, %s10
    %s12 = sshrl.u32 %s11, 2
    %s13 = sor.u32 %s11, %s12
    %s14 = sand.u32 15, %s13
    %v15 = vld [vmem:[%s0] sm:%s14]
    %v16 = vunpack.c.l.bf16 %v15
    %v17 = vunpack.c.h.bf16 %v15
    %18 = vst [vmem:[#allocation1] sm:%s5] %v16
    %v19 = vld [vmem:[#allocation1] sm:$0x1]
    %vm20 = vcmask 261120
    %21 = vst.msk [vmem:[#allocation0] sm:$0x1] %vm20, %v19
    %s22 = scalar_lea.vmem [#allocation1], 3
    %v23 = vld [vmem:[%s22] sm:$0x1]
    %24 = vrot.lane.b32.xlu0 %v23, 96
    %v25 = vpop.permute.xlu0 %24
    %vm26 = vcmask 1048320
    %27 = vst.msk [vmem:[#allocation0] sm:$0x1] %vm26, %v25
    %s28 = scalar_lea.vmem [#allocation1], 2
    %v29 = vld [vmem:[%s28] sm:$0x1]
    %30 = vrot.lane.b32.xlu0 %v29, 64
    %v31 = vpop.permute.xlu0 %30
    %vm32 = vcmask 785920
    %33 = vst.msk [vmem:[#allocation0] sm:$0x1] %vm32, %v31
    %s34 = scalar_lea.vmem [#allocation1], 1
    %v35 = vld [vmem:[%s34] sm:$0x1]
    %36 = vrot.lane.b32.xlu0 %v35, 32
    %v37 = vpop.permute.xlu0 %36
    %vm38 = vcmask 523520
    %39 = vst.msk [vmem:[#allocation0] sm:$0x1] %vm38, %v37
    %s41 = smul.u32 1, 2
    %s42 = sshll.u32 1, %s41
    %s43 = ssub.s32 %s42, 1
    %s44 = sshrl.u32 %s41, 1
    %v45 = vld [vmem:[#allocation0] sm:%s43]
    %v46 = vpack.c.bf16 0.0, %v45
    %s47 = sshll.u32 1, %s44
    %s48 = ssub.s32 %s47, 1
    %49 = vst [vmem:[%s1] sm:%s48] %v46

// kernel: pharmacophore_encoder.2
$region0: #{pharmacophore_encoder.2}
  #allocation0 [shape = 'u32[]', space=smem, size = 0x4, offset = 0x4, fixed_abs, tag = 'smem constant byte address 0x4 - core index']
  #allocation1 [shape = 'u32[144,128]{1,0:T(1,128)}', space=vmem, size = 0x12000, scoped, tag = 'internal scratch']
  %s0 = inlined_call_operand.vmem [shape: bf16[256,128], index: 0, kind: input, shape index: {}]
  %s1 = inlined_call_operand.vmem [shape: bf16[1,128], index: 1, kind: input, shape index: {}]
  %s2 = inlined_call_operand.vmem [shape: pred[4,256], index: 2, kind: input, shape index: {}]
  %s3 = inlined_call_operand.vmem [shape: bf16[4,256], index: 3, kind: input, shape index: {}]
  %s4 = inlined_call_operand.<no memory space> [shape: bf16[], index: 4, kind: input, shape index: {}]
  %s5 = inlined_call_operand.vmem [shape: f32[4,128], index: 5, kind: output, shape index: {}]
  %s6 = sld [smem:[#allocation0]]
  $region56: #{pharmacophore_encoder.2} parent=0
    _
  %s8 = ssub.s32 1, %s6
  %s9 = scalar_select 0, %s8, %s6
  %v10 = vstv %s4
  %v11 = vunpack.i.l.bf16 %v10
  %v13 = vunpack.i.h.bf16 %v10
  $region1: #{pharmacophore_encoder.2} parent=0
    #allocation2 [shape = 'u8[8192]{0}', space=vmem, size = 0x2000, scoped, tag = 'output window, operand 0, single buffered']
    #allocation3 [shape = 'u8[8192]{0}', space=vmem, size = 0x2000, dematerialized = true, scoped, tag = 'FusionAdapter Buffer %fusion.1 = bf16[4,256]{1,0:T(4,128)(2,1)} fusion(%param_2.10, %param_3.3, %param_4.3), kind=kLoop, calls=%fused_computation.7.clone, metadata={op_name="jit(pharmacophore_encoder)/jit(_take)/select_n" stack_frame_id=8}']
    // Predicated region
    $region2: #{pharmacophore_encoder.2} parent=1 // pred_check
      _
    $region3: #{pharmacophore_encoder.2} parent=1 // pred_check_branch
      %16 = sbr.rel (0) target = $region5
    $region4: #{pharmacophore_encoder.2} parent=1 // pred_region
      _
    $region5: #{pharmacophore_encoder.2} parent=1 // pred_fallthru
      _
    // Predicated region
    $region6: #{pharmacophore_encoder.2} parent=1 // pred_check
      _
    $region7: #{pharmacophore_encoder.2} parent=1 // pred_check_branch
      %18 = sbr.rel (0) target = $region9
    $region8: #{pharmacophore_encoder.2} parent=1 // pred_region
      _
    $region9: #{pharmacophore_encoder.2} parent=1 // pred_fallthru
      _
    // Predicated region
    $region10: #{pharmacophore_encoder.2} parent=1 // pred_check
      _
    $region11: #{pharmacophore_encoder.2} parent=1 // pred_check_branch
      %20 = sbr.rel (0) target = $region13
    $region12: #{pharmacophore_encoder.2} parent=1 // pred_region
      _
    $region13: #{pharmacophore_encoder.2} parent=1 // pred_fallthru
      _
    // Predicated region
    $region14: #{pharmacophore_encoder.2} parent=1 // pred_check
      _
    $region15: #{pharmacophore_encoder.2} parent=1 // pred_check_branch
      %22 = sbr.rel (0) target = $region17
    $region16: #{pharmacophore_encoder.2} parent=1 // pred_region
      _
    $region17: #{pharmacophore_encoder.2} parent=1 // pred_fallthru
      _
    %v23 = vld [vmem:[%s2] ss:$0 sm:$0x1]
    %v24 = vunpack.c.0.s8 %v23
    %v25 = vunpack.c.1.s8 %v23
    %v26 = vunpack.c.2.s8 %v23
    %v27 = vunpack.c.3.s8 %v23
    %s29 = sor.u32 15, 7
    %s30 = sand.u32 %s29, 5
    %s31 = sshrl.u32 %s30, 1
    %s32 = sor.u32 %s30, %s31
    %s33 = sand.u32 3, %s32
    %v34 = vld [vmem:[%s3] sm:%s33]
    %v35 = vunpack.c.l.bf16 %v34
    %v36 = vunpack.c.h.bf16 %v34
    %37 = xla_tuple %v24, %v35, %v11
    %38 = xla_tuple %37
    %vm39 = vcmp.ne.s32.totalorder %v24, 0
    %v40 = vsel %vm39, %v35, %v11
    %41 = xla_tuple %v40
    %v42 = vpack.c.bf16 0.0, %v40
    %s44 = ssub.s32 4, 1
    %45 = vst [vmem:[#allocation3] sm:%s44] %v42
    %s46 = scalar_lea.vmem %s2, 1
    %v47 = vld [vmem:[%s46] ss:$0 sm:$0x1]
    %v48 = vunpack.c.0.s8 %v47
    %v49 = vunpack.c.1.s8 %v47
    %v50 = vunpack.c.2.s8 %v47
    %v51 = vunpack.c.3.s8 %v47
    %s52 = scalar_lea.vmem %s3, 2
    %s54 = sor.u32 15, 7
    %s55 = sand.u32 %s54, 5
    %s56 = sshrl.u32 %s55, 1
    %s57 = sor.u32 %s55, %s56
    %s58 = sand.u32 3, %s57
    %v59 = vld [vmem:[%s52] sm:%s58]
    %v60 = vunpack.c.l.bf16 %v59
    %v61 = vunpack.c.h.bf16 %v59
    %62 = xla_tuple %v48, %v60, %v11
    %63 = xla_tuple %62
    %vm64 = vcmp.ne.s32.totalorder %v48, 0
    %v65 = vsel %vm64, %v60, %v11
    %66 = xla_tuple %v65
    %s67 = scalar_lea.vmem [#allocation3], 2
    %v68 = vpack.c.bf16 0.0, %v65
    %s70 = ssub.s32 4, 1
    %71 = vst [vmem:[%s67] sm:%s70] %v68
    %72 = xla_tuple 0, 0, %v11
    %73 = xla_tuple %72
    %74 = xla_tuple %v11
    %s75 = scalar_lea.vmem [#allocation3], 4
    %v76 = vpack.c.bf16 0.0, %v11
    %s78 = ssub.s32 4, 1
    %79 = vst [vmem:[%s75] sm:%s78] %v76
    %80 = xla_tuple 0, 0, %v11
    %81 = xla_tuple %80
    %82 = xla_tuple %v11
    %s83 = scalar_lea.vmem [#allocation3], 6
    %v84 = vpack.c.bf16 0.0, %v11
    %s86 = ssub.s32 4, 1
    %87 = vst [vmem:[%s83] sm:%s86] %v84
    %88 = xla_tuple 0, 0, %v11
    %89 = xla_tuple %88
    %90 = xla_tuple %v11
    %s91 = scalar_lea.vmem [#allocation3], 8
    %v92 = vpack.c.bf16 0.0, %v11
    %s94 = ssub.s32 4, 1
    %95 = vst [vmem:[%s91] sm:%s94] %v92
    %96 = xla_tuple 0, 0, %v11
    %97 = xla_tuple %96
    %98 = xla_tuple %v11
    %s99 = scalar_lea.vmem [#allocation3], 10
    %v100 = vpack.c.bf16 0.0, %v11
    %s102 = ssub.s32 4, 1
    %103 = vst [vmem:[%s99] sm:%s102] %v100
    %104 = xla_tuple 0, 0, %v11
    %105 = xla_tuple %104
    %106 = xla_tuple %v11
    %s107 = scalar_lea.vmem [#allocation3], 12
    %v108 = vpack.c.bf16 0.0, %v11
    %s110 = ssub.s32 4, 1
    %111 = vst [vmem:[%s107] sm:%s110] %v108
    %112 = xla_tuple 0, 0, %v11
    %113 = xla_tuple %112
    %114 = xla_tuple %v11
    %s115 = scalar_lea.vmem [#allocation3], 14
    %v116 = vpack.c.bf16 0.0, %v11
    %s118 = ssub.s32 4, 1
    %119 = vst [vmem:[%s115] sm:%s118] %v116
    %v121 = vld [vmem:[#allocation3] sm:$0xf]
    %v122 = vld [vmem:[#allocation3 + $0x4] sm:$0xf]
    %v123 = vld [vmem:[#allocation3 + $0x8] sm:$0xf]
    %v124 = vld [vmem:[#allocation3 + $0xc] sm:$0xf]
    %v125 = vld [vmem:[%s0] sm:$0xf]
    %v126 = vld [vmem:[%s0 + $0x4] sm:$0xf]
    %v127 = vld [vmem:[%s0 + $0x8] sm:$0xf]
    %v128 = vld [vmem:[%s0 + $0xc] sm:$0xf]
    %v129 = vld [vmem:[%s0 + $0x10] sm:$0xf]
    %v130 = vld [vmem:[%s0 + $0x14] sm:$0xf]
    %v131 = vld [vmem:[%s0 + $0x18] sm:$0xf]
    %v132 = vld [vmem:[%s0 + $0x1c] sm:$0xf]
    %v133 = vld [vmem:[%s0 + $0x20] sm:$0xf]
    %v134 = vld [vmem:[%s0 + $0x24] sm:$0xf]
    %v135 = vld [vmem:[%s0 + $0x28] sm:$0xf]
    %v136 = vld [vmem:[%s0 + $0x2c] sm:$0xf]
    %v137 = vld [vmem:[%s0 + $0x30] sm:$0xf]
    %v138 = vld [vmem:[%s0 + $0x34] sm:$0xf]
    %v139 = vld [vmem:[%s0 + $0x38] sm:$0xf]
    %v140 = vld [vmem:[%s0 + $0x3c] sm:$0xf]
    %v141 = vld [vmem:[%s0 + $0x40] sm:$0xf]
    %v142 = vld [vmem:[%s0 + $0x44] sm:$0xf]
    %v143 = vld [vmem:[%s0 + $0x48] sm:$0xf]
    %v144 = vld [vmem:[%s0 + $0x4c] sm:$0xf]
    %v145 = vld [vmem:[%s0 + $0x50] sm:$0xf]
    %v146 = vld [vmem:[%s0 + $0x54] sm:$0xf]
    %v147 = vld [vmem:[%s0 + $0x58] sm:$0xf]
    %v148 = vld [vmem:[%s0 + $0x5c] sm:$0xf]
    %v149 = vld [vmem:[%s0 + $0x60] sm:$0xf]
    %v150 = vld [vmem:[%s0 + $0x64] sm:$0xf]
    %v151 = vld [vmem:[%s0 + $0x68] sm:$0xf]
    %v152 = vld [vmem:[%s0 + $0x6c] sm:$0xf]
    %v153 = vld [vmem:[%s0 + $0x70] sm:$0xf]
    %v154 = vld [vmem:[%s0 + $0x74] sm:$0xf]
    %v155 = vld [vmem:[%s0 + $0x78] sm:$0xf]
    %v156 = vld [vmem:[%s0 + $0x7c] sm:$0xf]
    %v157 = vld [vmem:[%s1] sm:$0x1]
    %v158 = vunpack.c.l.bf16 %v157
    %v159 = vlaneseq
    %v160 = vshrl.u32 %v159, 7
    %v161 = vsub.s32 0, %v160
    %v162 = vrot.slane %v158, %v161
    %v167 = vcombine.low %v121, %v122
    %v168 = vcombine.low %v123, %v124
    %v170 = vunpack.c.l.s4 1983009808
    %v171 = vunpack.c.0.s8 %v170
    %v172 = vlaneseq
    %v173 = vshrl.u32 %v172, 7
    %v174 = vsub.s32 %v171, %v173
    %v175 = vrot.slane %v167, %v174
    %v177 = vunpack.c.l.s4 1983009808
    %v178 = vunpack.c.0.s8 %v177
    %v179 = vlaneseq
    %v180 = vshrl.u32 %v179, 7
    %v181 = vsub.s32 %v178, %v180
    %v182 = vrot.slane %v168, %v181
    %v183 = vcombine.low %v175, %v182
    %v184 = vcombine.high %v175, %v182
    %v219 = vunpack.c.l.b16 %v125
    %v220 = vunpack.c.l.b16 %v126
    %v221 = vunpack.c.l.b16 %v127
    %v222 = vunpack.c.l.b16 %v128
    %v223 = vunpack.c.l.b16 %v129
    %v224 = vunpack.c.l.b16 %v130
    %v225 = vunpack.c.l.b16 %v131
    %v226 = vunpack.c.l.b16 %v132
    %v227 = vunpack.c.l.b16 %v133
    %v228 = vunpack.c.l.b16 %v134
    %v229 = vunpack.c.l.b16 %v135
    %v230 = vunpack.c.l.b16 %v136
    %v231 = vunpack.c.l.b16 %v137
    %v232 = vunpack.c.l.b16 %v138
    %v233 = vunpack.c.l.b16 %v139
    %v234 = vunpack.c.l.b16 %v140
    %v235 = vunpack.c.l.b16 %v141
    %v236 = vunpack.c.l.b16 %v142
    %v237 = vunpack.c.l.b16 %v143
    %v238 = vunpack.c.l.b16 %v144
    %v239 = vunpack.c.l.b16 %v145
    %v240 = vunpack.c.l.b16 %v146
    %v241 = vunpack.c.l.b16 %v147
    %v242 = vunpack.c.l.b16 %v148
    %v243 = vunpack.c.l.b16 %v149
    %v244 = vunpack.c.l.b16 %v150
    %v245 = vunpack.c.l.b16 %v151
    %v246 = vunpack.c.l.b16 %v152
    %v247 = vunpack.c.l.b16 %v153
    %v248 = vunpack.c.l.b16 %v154
    %v249 = vunpack.c.l.b16 %v155
    %v250 = vunpack.c.l.b16 %v156
    %v251 = vpack.c.b16 %v220, %v219
    %v252 = vpack.c.b16 %v222, %v221
    %v253 = vpack.c.b16 %v224, %v223
    %v254 = vpack.c.b16 %v226, %v225
    %v255 = vpack.c.b16 %v228, %v227
    %v256 = vpack.c.b16 %v230, %v229
    %v257 = vpack.c.b16 %v232, %v231
    %v258 = vpack.c.b16 %v234, %v233
    %v259 = vpack.c.b16 %v236, %v235
    %v260 = vpack.c.b16 %v238, %v237
    %v261 = vpack.c.b16 %v240, %v239
    %v262 = vpack.c.b16 %v242, %v241
    %v263 = vpack.c.b16 %v244, %v243
    %v264 = vpack.c.b16 %v246, %v245
    %v265 = vpack.c.b16 %v248, %v247
    %v266 = vpack.c.b16 %v250, %v249
    %283 = vmatprep.subr.bf16.mxu0 0
    %284 = vmatpush1.bf16.msra.mxu0 %v258
    %285 = vmatprep.subr.bf16.mxu0 0
    %286 = vmatpush1.bf16.msra.mxu0 %v257
    %287 = vmatprep.subr.bf16.mxu0 0
    %288 = vmatpush1.bf16.msra.mxu0 %v256
    %289 = vmatprep.subr.bf16.mxu0 0
    %290 = vmatpush1.bf16.msra.mxu0 %v255
    %291 = vmatprep.subr.bf16.mxu0 0
    %292 = vmatpush1.bf16.msra.mxu0 %v254
    %293 = vmatprep.subr.bf16.mxu0 0
    %294 = vmatpush1.bf16.msra.mxu0 %v253
    %295 = vmatprep.subr.bf16.mxu0 0
    %296 = vmatpush1.bf16.msra.mxu0 %v252
    %297 = vmatprep.subr.bf16.mxu0 0
    %298 = vmatpush1.bf16.msra.mxu0 %v251
    %299 = vmatprep.subr.bf16.mxu0 0
    %300 = vmatpush2.bf16.msra.mxu0 %v266
    %301 = vmatprep.subr.bf16.mxu0 0
    %302 = vmatpush2.bf16.msra.mxu0 %v265
    %303 = vmatprep.subr.bf16.mxu0 0
    %304 = vmatpush2.bf16.msra.mxu0 %v264
    %305 = vmatprep.subr.bf16.mxu0 0
    %306 = vmatpush2.bf16.msra.mxu0 %v263
    %307 = vmatprep.subr.bf16.mxu0 0
    %308 = vmatpush2.bf16.msra.mxu0 %v262
    %309 = vmatprep.subr.bf16.mxu0 0
    %310 = vmatpush2.bf16.msra.mxu0 %v261
    %311 = vmatprep.subr.bf16.mxu0 0
    %312 = vmatpush2.bf16.msra.mxu0 %v260
    %313 = vmatprep.subr.bf16.mxu0 0
    %314 = vmatpush2.bf16.msra.mxu0 %v259
    %315 = vmatprep.mubr.bf16.mxu0 %v184
    %316 = vmatmul.mubr.bf16.gmra.mxu0 %v183
    %v317 = vpop.f32.mrf.mxu0
    %v318 = vadd.f32 %v162, %v317
    %v319 = vpop.f32.mrf.mxu0
    %v320 = vpop.f32.mrf.mxu0
    %v321 = vadd.f32 %v162, %v320
    %v322 = vpop.f32.mrf.mxu0
    %323 = vdwg.mxu0
    %v324 = vmax.f32 %v318, 0.0
    %v325 = vmax.f32 %v321, 0.0
    %326 = vst [vmem:[#allocation2] sm:$0xff] %v324
    %327 = vst [vmem:[#allocation2 + $0x8] sm:$0xff] %v325
    // Predicated region
    $region18: #{pharmacophore_encoder.2} parent=1 // pred_check
      _
    $region19: #{pharmacophore_encoder.2} parent=1 // pred_check_branch
      %329 = sbr.rel (0) target = $region21
    $region20: #{pharmacophore_encoder.2} parent=1 // pred_region
      // Predicated region
      $region22: #{pharmacophore_encoder.2} parent=20 // pred_check
        _
      $region23: #{pharmacophore_encoder.2} parent=20 // pred_check_branch
        %331 = sbr.rel (0) target = $region25
      $region24: #{pharmacophore_encoder.2} parent=20 // pred_region
        // Predicated region
        $region26: #{pharmacophore_encoder.2} parent=24 // pred_check
          _
        $region27: #{pharmacophore_encoder.2} parent=24 // pred_check_branch
          %333 = sbr.rel target = $region29
        $region28: #{pharmacophore_encoder.2} parent=24 // pred_region
          // Predicated region
          $region41: #{pharmacophore_encoder.2} parent=28 // pred_check
            _
          $region42: #{pharmacophore_encoder.2} parent=28 // pred_check_branch
            %349 = sbr.rel (0) target = $region44
          $region43: #{pharmacophore_encoder.2} parent=28 // pred_region
            %s351 = ssub.s32 16, 1
            loop: start=0, step=1, limit=1
            $region45: #{pharmacophore_encoder.2} parent=43 // loop_pre_header
              _
            $region46: #{pharmacophore_encoder.2} parent=43 // loop_header
              %s353 = sphi 0, %s357
              %p354 = scmp.ge.s32.totalorder %s353, 1
              %s358 = sphi [#allocation2], [#allocation2]
              %s359 = sphi %s5, %s5
            $region47: #{pharmacophore_encoder.2} parent=43 // loop_header_branch
              %356 = sbr.rel (%p354) target = $region51
            $region48: #{pharmacophore_encoder.2} parent=43 // loop_body
              %v360 = vld [vmem:[%s358] sm:%s351]
              %361 = vst [vmem:[%s359] sm:%s351] %v360
            $region49: #{pharmacophore_encoder.2} parent=43 // loop_footer
              %s357 = sadd.s32 1, %s353
            $region50: #{pharmacophore_encoder.2} parent=43 // loop_footer_branch
              %352 = sbr.rel target = $region46
            $region51: #{pharmacophore_encoder.2} parent=43 // loop_exit
              _
          $region44: #{pharmacophore_encoder.2} parent=28 // pred_fallthru
            _
        $region29: #{pharmacophore_encoder.2} parent=24 // pred_fallthru
          _
        // Predicated region
        $region30: #{pharmacophore_encoder.2} parent=24 // pred_check
          _
        $region31: #{pharmacophore_encoder.2} parent=24 // pred_check_branch
          %335 = sbr.rel (0) target = $region33
        $region32: #{pharmacophore_encoder.2} parent=24 // pred_region
          %s337 = ssub.s32 16, 1
          loop: start=0, step=1, limit=1
          $region34: #{pharmacophore_encoder.2} parent=32 // loop_pre_header
            _
          $region35: #{pharmacophore_encoder.2} parent=32 // loop_header
            %s339 = sphi 0, %s343
            %p340 = scmp.ge.s32.totalorder %s339, 1
            %s344 = sphi [#allocation2], [#allocation2]
            %s345 = sphi %s5, %s5
          $region36: #{pharmacophore_encoder.2} parent=32 // loop_header_branch
            %342 = sbr.rel (%p340) target = $region40
          $region37: #{pharmacophore_encoder.2} parent=32 // loop_body
            %v346 = vld [vmem:[%s344] sm:%s337]
            %347 = vst [vmem:[%s345] sm:%s337] %v346
          $region38: #{pharmacophore_encoder.2} parent=32 // loop_footer
            %s343 = sadd.s32 1, %s339
          $region39: #{pharmacophore_encoder.2} parent=32 // loop_footer_branch
            %338 = sbr.rel target = $region35
          $region40: #{pharmacophore_encoder.2} parent=32 // loop_exit
            _
        $region33: #{pharmacophore_encoder.2} parent=24 // pred_fallthru
          _
      $region25: #{pharmacophore_encoder.2} parent=20 // pred_fallthru
        _
      %362 = vnop
    $region21: #{pharmacophore_encoder.2} parent=1 // pred_fallthru
      _
    // Predicated region
    $region52: #{pharmacophore_encoder.2} parent=1 // pred_check
      _
    $region53: #{pharmacophore_encoder.2} parent=1 // pred_check_branch
      %364 = sbr.rel (0) target = $region55
    $region54: #{pharmacophore_encoder.2} parent=1 // pred_region
      _
    $region55: #{pharmacophore_encoder.2} parent=1 // pred_fallthru
      _

</llo_original>
